<compile_context>
chip_gen: v7x
topology: tpu7x:2x2x1
jax: 0.10.0
libtpu: 0.0.40
codegen_flags: <defaults>
</compile_context>

<pallas_src>
import math

import jax
import jax.numpy as jnp
from jax import lax
from jax.experimental import pallas as pl
from jax.experimental.pallas import tpu as pltpu


def mlp_kernel(x_ref, w1_ref, b1_ref, w2_ref, b2_ref, o_ref):
    # Layer 1 on the MXU: (BT, 64)[bf16] @ (64, 32)[bf16] -> f32 accumulate.
    h = jnp.dot(x_ref[...], w1_ref[...], preferred_element_type=jnp.float32)
    # Bias + ReLU in f32 (keeps the elementwise tail off bf16 paths; v5e-safe).
    h = jnp.maximum(h + b1_ref[...], 0.0)
    # Layer 2: contract the hidden dim of the (1, 32) w2 row with (BT, 32) h.
    # Result is (1, BT): batch on the lane axis -> lane-dense output store,
    # no N=1-column result / masked vst.
    z = lax.dot_general(
        w2_ref[...], h,
        dimension_numbers=(((1,), (1,)), ((), ())),
        preferred_element_type=jnp.float32,
    )
    z = z + b2_ref[0, 0]  # scalar bias from SMEM
    # Sigmoid: exp on the EUP, approximate reciprocal also on the EUP.
    o_ref[...] = pl.reciprocal(1.0 + jnp.exp(-z), approx=True).astype(o_ref.dtype)


def enhanced_nn_forward(x, w1_t, b1, w2_t, b2, *, block_b=512,
                        matmul_dtype=jnp.bfloat16):
    """Forward pass of EnhancedNN.

    x    : (B, 64)  activations
    w1_t : (64, 32) first-layer weight, stored transposed (PyTorch weight.T)
    b1   : (1, 32)
    w2_t : (1, 32)  second-layer weight in native PyTorch (out, in) layout
    b2   : (1, 1)
    Returns (B, 1) float32 probabilities.
    """
    B, f_in = x.shape
    hid = w1_t.shape[1]
    assert block_b % 128 == 0

    # Lane-dense batch tile: at least 128 rows, at most `block_b` (sized well under
    # v7x's 64 MiB VMEM even with double buffering).
    bt = min(block_b, 128 * pl.cdiv(B, 128))
    num_tiles = pl.cdiv(B, bt)
    b_pad = num_tiles * bt

    # bf16 MXU operands (f32 accumulation in-kernel); biases / w2 stay f32.
    x_p = jnp.pad(x.astype(matmul_dtype), ((0, b_pad - B), (0, 0)))
    w1_c = w1_t.astype(matmul_dtype)

    out = pl.pallas_call(
        mlp_kernel,
        out_shape=jax.ShapeDtypeStruct((1, b_pad), jnp.float32),
        grid=(num_tiles,),
        in_specs=[
            pl.BlockSpec((bt, f_in), lambda i: (i, 0)),          # x: streamed per tile
            pl.BlockSpec((f_in, hid), lambda i: (0, 0)),         # W1: VMEM-resident
            pl.BlockSpec((1, hid), lambda i: (0, 0)),            # b1: VMEM-resident
            pl.BlockSpec((1, hid), lambda i: (0, 0)),            # w2 row: VMEM-resident
            pl.BlockSpec(memory_space=pltpu.MemorySpace.SMEM),   # b2: SMEM scalar
        ],
        out_specs=pl.BlockSpec((1, bt), lambda i: (0, i)),       # lane-dense writeback
        compiler_params=pltpu.CompilerParams(
            dimension_semantics=("parallel",),                   # megacore / 2-TC v7x
        ),
    )(x_p, w1_c, b1, w2_t, b2)

    return out.reshape(-1)[:B].reshape(B, 1)


def xavier_uniform(key, shape, dtype=jnp.float32):
    # torch.nn.init.xavier_uniform_ (gain=1) on a torch-layout (out, in) weight.
    fan_out, fan_in = shape
    a = math.sqrt(6.0 / (fan_in + fan_out))
    return jax.random.uniform(key, shape, dtype=dtype, minval=-a, maxval=a)


if __name__ == "__main__":
    key = jax.random.PRNGKey(0)
    k_x, k_w1, k_w2 = jax.random.split(key, 3)

    B = 8
    IN, HID = 64, 32  # hidden_layers = [64, 32]

    # Deterministic params matching EnhancedNN.init_weights (xavier weights, zero bias).
    w1_torch = xavier_uniform(k_w1, (HID, IN))   # (32, 64) torch layout
    w2_torch = xavier_uniform(k_w2, (1, HID))    # (1, 32)  torch layout
    w1_t = w1_torch.T                            # (64, 32) for x @ W1
    b1 = jnp.zeros((1, HID), jnp.float32)
    b2 = jnp.zeros((1, 1), jnp.float32)

    x = jax.random.normal(k_x, (B, IN), dtype=jnp.float32)

    fwd = jax.jit(enhanced_nn_forward)
    out = jax.block_until_ready(fwd(x, w1_t, b1, w2_torch, b2))
    assert out.shape == (B, 1)

    # Reference with the same bf16-rounded MXU inputs (tight tolerance).
    xb = x.astype(jnp.bfloat16).astype(jnp.float32)
    w1b = w1_t.astype(jnp.bfloat16).astype(jnp.float32)
    h_ref = jnp.maximum(xb @ w1b + b1, 0.0)
    ref_bf16 = jax.nn.sigmoid(h_ref @ w2_torch.T + b2)
    assert jnp.allclose(out, ref_bf16, atol=5e-3, rtol=5e-3), (
        float(jnp.max(jnp.abs(out - ref_bf16))))

    # Full-f32 semantic reference (loose tolerance absorbs the bf16 input cast).
    ref_f32 = jax.nn.sigmoid(jnp.maximum(x @ w1_t + b1, 0.0) @ w2_torch.T + b2)
    assert jnp.allclose(out, ref_f32, atol=2e-2, rtol=2e-2)

    print("KERNEL_OK")
</pallas_src>

<mosaic_0001>
module attributes {stable_mosaic.version = 11 : i64} {
  func.func @mlp_kernel(%arg0: i32, %arg1: memref<128x64xbf16, #tpu.memory_space<vmem>>, %arg2: memref<64x32xbf16, #tpu.memory_space<vmem>>, %arg3: memref<1x32xf32, #tpu.memory_space<vmem>>, %arg4: memref<1x32xf32, #tpu.memory_space<vmem>>, %arg5: memref<1x1xf32, #tpu.memory_space<smem>>, %arg6: memref<1x128xf32, #tpu.memory_space<vmem>>) attributes {dimension_semantics = [#tpu.dimension_semantics<parallel>], iteration_bounds = array<i64: 1>, scalar_prefetch = 0 : i64, scratch_operands = 0 : i64, tpu.core_type = #tpu.core_type<tc>, window_params = [{transform_indices = @transform_0, window_bounds = array<i64: 128, 64>}, {pipeline_mode = #tpu.pipeline_mode<synchronous>, transform_indices = @transform_1, window_bounds = array<i64: 64, 32>}, {pipeline_mode = #tpu.pipeline_mode<synchronous>, transform_indices = @transform_2, window_bounds = array<i64: 1, 32>}, {pipeline_mode = #tpu.pipeline_mode<synchronous>, transform_indices = @transform_3, window_bounds = array<i64: 1, 32>}, {transform_indices = @transform_4, window_bounds = array<i64: 1, 1>}, {transform_indices = @transform_5, window_bounds = array<i64: 1, 128>}]} {
    %c0 = arith.constant 0 : index
    %c0_0 = arith.constant 0 : index
    %0 = vector.load %arg1[%c0, %c0_0] : memref<128x64xbf16, #tpu.memory_space<vmem>>, vector<128x64xbf16>
    %c0_1 = arith.constant 0 : index
    %c0_2 = arith.constant 0 : index
    %1 = vector.load %arg2[%c0_1, %c0_2] : memref<64x32xbf16, #tpu.memory_space<vmem>>, vector<64x32xbf16>
    %cst = arith.constant dense<0.000000e+00> : vector<128x32xf32>
    %2 = tpu.matmul %0, %1, %cst {dimension_numbers = #tpu.dot_dimension_numbers<[1], [0], [0], [1], [0, 0, 1, 1], [], []>} : vector<128x64xbf16>, vector<64x32xbf16>, vector<128x32xf32> -> vector<128x32xf32>
    %c0_3 = arith.constant 0 : index
    %c0_4 = arith.constant 0 : index
    %3 = vector.load %arg3[%c0_3, %c0_4] : memref<1x32xf32, #tpu.memory_space<vmem>>, vector<1x32xf32>
    %4 = vector.broadcast %3 : vector<1x32xf32> to vector<128x32xf32>
    %5 = arith.addf %2, %4 : vector<128x32xf32>
    %cst_5 = arith.constant 0.000000e+00 : f32
    %6 = vector.broadcast %cst_5 : f32 to vector<128x32xf32>
    %7 = arith.maximumf %5, %6 : vector<128x32xf32>
    %c0_6 = arith.constant 0 : index
    %c0_7 = arith.constant 0 : index
    %8 = vector.load %arg4[%c0_6, %c0_7] : memref<1x32xf32, #tpu.memory_space<vmem>>, vector<1x32xf32>
    %cst_8 = arith.constant dense<0.000000e+00> : vector<1x128xf32>
    %9 = tpu.matmul %8, %7, %cst_8 {dimension_numbers = #tpu.dot_dimension_numbers<[1], [1], [0], [0], [0, 0, 1, 0], [], []>} : vector<1x32xf32>, vector<128x32xf32>, vector<1x128xf32> -> vector<1x128xf32>
    %c0_9 = arith.constant 0 : index
    %c0_10 = arith.constant 0 : index
    %10 = memref.load %arg5[%c0_9, %c0_10] : memref<1x1xf32, #tpu.memory_space<smem>>
    %11 = vector.broadcast %10 : f32 to vector<1x128xf32>
    %12 = arith.addf %9, %11 : vector<1x128xf32>
    %cst_11 = arith.constant 0.000000e+00 : f32
    %13 = vector.broadcast %cst_11 : f32 to vector<1x128xf32>
    %14 = arith.subf %13, %12 : vector<1x128xf32>
    %15 = math.exp %14 : vector<1x128xf32>
    %cst_12 = arith.constant 1.000000e+00 : f32
    %16 = vector.broadcast %cst_12 : f32 to vector<1x128xf32>
    %17 = arith.addf %16, %15 : vector<1x128xf32>
    %18 = tpu.reciprocal %17 {approx = true} : vector<1x128xf32> -> vector<1x128xf32>
    %c0_13 = arith.constant 0 : index
    %c0_14 = arith.constant 0 : index
    %19 = vector.load %arg6[%c0_13, %c0_14] : memref<1x128xf32, #tpu.memory_space<vmem>>, vector<1x128xf32>
    tpu.vector_store %arg6[%c0_13, %c0_14], %18 {strides = array<i32>} : memref<1x128xf32, #tpu.memory_space<vmem>>, vector<1x128xf32>,
    return
  }
  func.func @transform_0(%arg0: i32) -> (i32, i32) {
    %c0_i32 = arith.constant 0 : i32
    %c0_i32_0 = arith.constant 0 : i32
    return %arg0, %c0_i32 : i32, i32
  }
  func.func @transform_1(%arg0: i32) -> (i32, i32) {
    %c0_i32 = arith.constant 0 : i32
    %c0_i32_0 = arith.constant 0 : i32
    %c0_i32_1 = arith.constant 0 : i32
    return %c0_i32, %c0_i32_0 : i32, i32
  }
  func.func @transform_2(%arg0: i32) -> (i32, i32) {
    %c0_i32 = arith.constant 0 : i32
    %c0_i32_0 = arith.constant 0 : i32
    %c0_i32_1 = arith.constant 0 : i32
    return %c0_i32, %c0_i32_0 : i32, i32
  }
  func.func @transform_3(%arg0: i32) -> (i32, i32) {
    %c0_i32 = arith.constant 0 : i32
    %c0_i32_0 = arith.constant 0 : i32
    %c0_i32_1 = arith.constant 0 : i32
    return %c0_i32, %c0_i32_0 : i32, i32
  }
  func.func @transform_4(%arg0: i32) -> (i32, i32) {
    %c0_i32 = arith.constant 0 : i32
    %c0_i32_0 = arith.constant 0 : i32
    %c0_i32_1 = arith.constant 0 : i32
    return %c0_i32, %c0_i32_0 : i32, i32
  }
  func.func @transform_5(%arg0: i32) -> (i32, i32) {
    %c0_i32 = arith.constant 0 : i32
    %c0_i32_0 = arith.constant 0 : i32
    return %c0_i32, %arg0 : i32, i32
  }
}

</mosaic_0001>

<llo_original>
// kernel: enhanced_nn_forward.1
$region0: #{enhanced_nn_forward.1}
  #allocation0 [shape = 'u32[]', space=smem, size = 0x4, offset = 0x4, fixed_abs, tag = 'smem constant byte address 0x4 - core index']
  #allocation1 [shape = 'u32[144,128]{1,0:T(1,128)}', space=vmem, size = 0x12000, scoped, tag = 'internal scratch']
  #allocation2 [shape = 'f32[1,1]{1,0:T(1,128)S(6)}', space=smem, size = 0x200, scoped, tag = 'scoped memory for enhanced_nn_forward.1']
  %s0 = inlined_call_operand.vmem [shape: bf16[128,64], index: 0, kind: input, shape index: {}]
  %s1 = inlined_call_operand.vmem [shape: bf16[64,32], index: 1, kind: input, shape index: {}]
  %s2 = inlined_call_operand.vmem [shape: f32[1,32], index: 2, kind: input, shape index: {}]
  %s3 = inlined_call_operand.vmem [shape: f32[1,32], index: 3, kind: input, shape index: {}]
  %s4 = inlined_call_operand.<no memory space> [shape: f32[1,1], index: 4, kind: input, shape index: {}]
  %s5 = inlined_call_operand.vmem [shape: f32[1,128], index: 5, kind: output, shape index: {}]
  %s6 = sld [smem:[#allocation0]]
  $region30: #{enhanced_nn_forward.1} parent=0
    _
  %s8 = ssub.s32 1, %s6
  %s9 = scalar_select 0, %s8, %s6
  %10 = sst [smem:[#allocation2]] %s4
  // Predicated region
  $region2: #{enhanced_nn_forward.1} parent=0 // pred_check
    _
  $region3: #{enhanced_nn_forward.1} parent=0 // pred_check_branch
    %12 = sbr.rel (0) target = $region5
  $region4: #{enhanced_nn_forward.1} parent=0 // pred_region
    _
  $region5: #{enhanced_nn_forward.1} parent=0 // pred_fallthru
    _
  // Predicated region
  $region6: #{enhanced_nn_forward.1} parent=0 // pred_check
    _
  $region7: #{enhanced_nn_forward.1} parent=0 // pred_check_branch
    %14 = sbr.rel (0) target = $region9
  $region8: #{enhanced_nn_forward.1} parent=0 // pred_region
    _
  $region9: #{enhanced_nn_forward.1} parent=0 // pred_fallthru
    _
  // Predicated region
  $region10: #{enhanced_nn_forward.1} parent=0 // pred_check
    _
  $region11: #{enhanced_nn_forward.1} parent=0 // pred_check_branch
    %16 = sbr.rel (0) target = $region13
  $region12: #{enhanced_nn_forward.1} parent=0 // pred_region
    _
  $region13: #{enhanced_nn_forward.1} parent=0 // pred_fallthru
    _
  // Predicated region
  $region14: #{enhanced_nn_forward.1} parent=0 // pred_check
    _
  $region15: #{enhanced_nn_forward.1} parent=0 // pred_check_branch
    %18 = sbr.rel (0) target = $region17
  $region16: #{enhanced_nn_forward.1} parent=0 // pred_region
    _
  $region17: #{enhanced_nn_forward.1} parent=0 // pred_fallthru
    _
  // Predicated region
  $region18: #{enhanced_nn_forward.1} parent=0 // pred_check
    _
  $region19: #{enhanced_nn_forward.1} parent=0 // pred_check_branch
    %20 = sbr.rel (0) target = $region21
  $region20: #{enhanced_nn_forward.1} parent=0 // pred_region
    _
  $region21: #{enhanced_nn_forward.1} parent=0 // pred_fallthru
    _
  %v22 = vld [vmem:[%s0] sm:$0xf]
  %v23 = vld [vmem:[%s0 + $0x4] sm:$0xf]
  %v24 = vld [vmem:[%s0 + $0x8] sm:$0xf]
  %v25 = vld [vmem:[%s0 + $0xc] sm:$0xf]
  %v26 = vld [vmem:[%s0 + $0x10] sm:$0xf]
  %v27 = vld [vmem:[%s0 + $0x14] sm:$0xf]
  %v28 = vld [vmem:[%s0 + $0x18] sm:$0xf]
  %v29 = vld [vmem:[%s0 + $0x1c] sm:$0xf]
  %v30 = vld [vmem:[%s0 + $0x20] sm:$0xf]
  %v31 = vld [vmem:[%s0 + $0x24] sm:$0xf]
  %v32 = vld [vmem:[%s0 + $0x28] sm:$0xf]
  %v33 = vld [vmem:[%s0 + $0x2c] sm:$0xf]
  %v34 = vld [vmem:[%s0 + $0x30] sm:$0xf]
  %v35 = vld [vmem:[%s0 + $0x34] sm:$0xf]
  %v36 = vld [vmem:[%s0 + $0x38] sm:$0xf]
  %v37 = vld [vmem:[%s0 + $0x3c] sm:$0xf]
  %v38 = vld [vmem:[%s1] sm:$0xf]
  %v39 = vld [vmem:[%s1 + $0x4] sm:$0xf]
  %v40 = vld [vmem:[%s1 + $0x8] sm:$0xf]
  %v41 = vld [vmem:[%s1 + $0xc] sm:$0xf]
  %v42 = vld [vmem:[%s1 + $0x10] sm:$0xf]
  %v43 = vld [vmem:[%s1 + $0x14] sm:$0xf]
  %v44 = vld [vmem:[%s1 + $0x18] sm:$0xf]
  %v45 = vld [vmem:[%s1 + $0x1c] sm:$0xf]
  %v46 = vld [vmem:[%s2] sm:$0x1]
  %v48 = vlaneseq
  %v49 = vshrl.u32 %v48, 7
  %v50 = vsub.s32 0, %v49
  %v51 = vrot.slane %v46, %v50
  %v69 = vunpack.c.l.b16 %v22
  %v70 = vunpack.c.l.b16 %v23
  %v71 = vunpack.c.l.b16 %v24
  %v72 = vunpack.c.l.b16 %v25
  %v73 = vunpack.c.l.b16 %v26
  %v74 = vunpack.c.l.b16 %v27
  %v75 = vunpack.c.l.b16 %v28
  %v76 = vunpack.c.l.b16 %v29
  %v77 = vunpack.c.l.b16 %v30
  %v78 = vunpack.c.l.b16 %v31
  %v79 = vunpack.c.l.b16 %v32
  %v80 = vunpack.c.l.b16 %v33
  %v81 = vunpack.c.l.b16 %v34
  %v82 = vunpack.c.l.b16 %v35
  %v83 = vunpack.c.l.b16 %v36
  %v84 = vunpack.c.l.b16 %v37
  %v85 = vpack.c.b16 %v70, %v69
  %v86 = vpack.c.b16 %v72, %v71
  %v87 = vpack.c.b16 %v74, %v73
  %v88 = vpack.c.b16 %v76, %v75
  %v89 = vpack.c.b16 %v78, %v77
  %v90 = vpack.c.b16 %v80, %v79
  %v91 = vpack.c.b16 %v82, %v81
  %v92 = vpack.c.b16 %v84, %v83
  %v101 = vunpack.c.l.b16 %v38
  %v102 = vunpack.c.l.b16 %v39
  %v103 = vunpack.c.l.b16 %v40
  %v104 = vunpack.c.l.b16 %v41
  %v105 = vunpack.c.l.b16 %v42
  %v106 = vunpack.c.l.b16 %v43
  %v107 = vunpack.c.l.b16 %v44
  %v108 = vunpack.c.l.b16 %v45
  %v109 = vpack.c.b16 %v102, %v101
  %v110 = vpack.c.b16 %v104, %v103
  %v111 = vpack.c.b16 %v106, %v105
  %v112 = vpack.c.b16 %v108, %v107
  %vm117 = vcmask 523264
  %v119 = vsel %vm117, %v85, 0
  %v122 = vsel %vm117, %v86, 0
  %v125 = vsel %vm117, %v87, 0
  %v128 = vsel %vm117, %v88, 0
  %v131 = vsel %vm117, %v89, 0
  %v134 = vsel %vm117, %v90, 0
  %v137 = vsel %vm117, %v91, 0
  %v140 = vsel %vm117, %v92, 0
  %142 = vmatprep.subr.bf16.mxu0 0
  %143 = vmatpush1.bf16.msra.mxu0 %v109
  %144 = vmatprep.subr.bf16.mxu0 0
  %145 = vmatpush1.bf16.msra.mxu0 %v110
  %146 = vmatprep.subr.bf16.mxu0 0
  %147 = vmatpush1.bf16.msra.mxu0 %v111
  %148 = vmatprep.subr.bf16.mxu0 0
  %149 = vmatpush1.bf16.msra.mxu0 %v112
  %150 = vmatprep.subr.bf16.mxu0 0
  %151 = vmatpush1.bf16.msra.mxu0 0
  %152 = vmatprep.subr.bf16.mxu0 0
  %153 = vmatpush1.bf16.msra.mxu0 0
  %154 = vmatprep.subr.bf16.mxu0 0
  %155 = vmatpush1.bf16.msra.mxu0 0
  %156 = vmatprep.subr.bf16.mxu0 0
  %157 = vmatpush1.bf16.msra.mxu0 0
  %158 = vmatprep.subr.bf16.mxu0 0
  %159 = vmatpush1.bf16.msra.mxu0 0
  %160 = vmatprep.subr.bf16.mxu0 0
  %161 = vmatpush1.bf16.msra.mxu0 0
  %162 = vmatprep.subr.bf16.mxu0 0
  %163 = vmatpush1.bf16.msra.mxu0 0
  %164 = vmatprep.subr.bf16.mxu0 0
  %165 = vmatpush1.bf16.msra.mxu0 0
  %166 = vmatprep.subr.bf16.mxu0 0
  %167 = vmatpush1.bf16.msra.mxu0 0
  %168 = vmatprep.subr.bf16.mxu0 0
  %169 = vmatpush1.bf16.msra.mxu0 0
  %170 = vmatprep.subr.bf16.mxu0 0
  %171 = vmatpush1.bf16.msra.mxu0 0
  %172 = vmatprep.subr.bf16.mxu0 0
  %173 = vmatpush1.bf16.msra.mxu0 0
  %174 = vmatprep.mubr.bf16.mxu0 0
  %175 = vmatmul.mubr.bf16.gmra.mrb[0].mxu0 %v119
  %v176 = vpop.f32.mrb[0].mxu0
  %v177 = vadd.f32 %v51, %v176
  %v178 = vpop.f32.mrb[0].mxu0
  %v179 = vpop.f32.mrb[0].mxu0
  %v180 = vadd.f32 %v51, %v179
  %v181 = vpop.f32.mrb[0].mxu0
  %182 = vmatprep.mubr.bf16.mxu0 0
  %183 = vmatmul.mubr.bf16.gmra.mrb[0].mxu0 %v122
  %v184 = vpop.f32.mrb[0].mxu0
  %v185 = vadd.f32 %v51, %v184
  %v186 = vpop.f32.mrb[0].mxu0
  %v187 = vpop.f32.mrb[0].mxu0
  %v188 = vadd.f32 %v51, %v187
  %v189 = vpop.f32.mrb[0].mxu0
  %190 = vmatprep.mubr.bf16.mxu0 0
  %191 = vmatmul.mubr.bf16.gmra.mrb[0].mxu0 %v125
  %v192 = vpop.f32.mrb[0].mxu0
  %v193 = vadd.f32 %v51, %v192
  %v194 = vpop.f32.mrb[0].mxu0
  %v195 = vpop.f32.mrb[0].mxu0
  %v196 = vadd.f32 %v51, %v195
  %v197 = vpop.f32.mrb[0].mxu0
  %198 = vmatprep.mubr.bf16.mxu0 0
  %199 = vmatmul.mubr.bf16.gmra.mrb[0].mxu0 %v128
  %v200 = vpop.f32.mrb[0].mxu0
  %v201 = vadd.f32 %v51, %v200
  %v202 = vpop.f32.mrb[0].mxu0
  %v203 = vpop.f32.mrb[0].mxu0
  %v204 = vadd.f32 %v51, %v203
  %v205 = vpop.f32.mrb[0].mxu0
  %206 = vmatprep.mubr.bf16.mxu0 0
  %207 = vmatmul.mubr.bf16.gmra.mrb[0].mxu0 %v131
  %v208 = vpop.f32.mrb[0].mxu0
  %v209 = vadd.f32 %v51, %v208
  %v210 = vpop.f32.mrb[0].mxu0
  %v211 = vpop.f32.mrb[0].mxu0
  %v212 = vadd.f32 %v51, %v211
  %v213 = vpop.f32.mrb[0].mxu0
  %214 = vmatprep.mubr.bf16.mxu0 0
  %215 = vmatmul.mubr.bf16.gmra.mrb[0].mxu0 %v134
  %v216 = vpop.f32.mrb[0].mxu0
  %v217 = vadd.f32 %v51, %v216
  %v218 = vpop.f32.mrb[0].mxu0
  %v219 = vpop.f32.mrb[0].mxu0
  %v220 = vadd.f32 %v51, %v219
  %v221 = vpop.f32.mrb[0].mxu0
  %222 = vmatprep.mubr.bf16.mxu0 0
  %223 = vmatmul.mubr.bf16.gmra.mrb[0].mxu0 %v137
  %v224 = vpop.f32.mrb[0].mxu0
  %v225 = vadd.f32 %v51, %v224
  %v226 = vpop.f32.mrb[0].mxu0
  %v227 = vpop.f32.mrb[0].mxu0
  %v228 = vadd.f32 %v51, %v227
  %v229 = vpop.f32.mrb[0].mxu0
  %230 = vmatprep.mubr.bf16.mxu0 0
  %231 = vmatmul.mubr.bf16.gmra.mrb[0].mxu0 %v140
  %v232 = vpop.f32.mrb[0].mxu0
  %v233 = vadd.f32 %v51, %v232
  %v234 = vpop.f32.mrb[0].mxu0
  %v235 = vpop.f32.mrb[0].mxu0
  %v236 = vadd.f32 %v51, %v235
  %v237 = vpop.f32.mrb[0].mxu0
  %238 = vdwg.mxu0
  %v239 = vmax.f32 %v177, 0.0
  %v240 = vmax.f32 %v180, 0.0
  %v241 = vmax.f32 %v185, 0.0
  %v242 = vmax.f32 %v188, 0.0
  %v243 = vmax.f32 %v193, 0.0
  %v244 = vmax.f32 %v196, 0.0
  %v245 = vmax.f32 %v201, 0.0
  %v246 = vmax.f32 %v204, 0.0
  %v247 = vmax.f32 %v209, 0.0
  %v248 = vmax.f32 %v212, 0.0
  %v249 = vmax.f32 %v217, 0.0
  %v250 = vmax.f32 %v220, 0.0
  %v251 = vmax.f32 %v225, 0.0
  %v252 = vmax.f32 %v228, 0.0
  %v253 = vmax.f32 %v233, 0.0
  %v254 = vmax.f32 %v236, 0.0
  %v255 = vld [vmem:[%s3] sm:$0x1]
  %s256 = sld [smem:[#allocation2]]
  %v257 = vstv %s256
  %vm258 = vcmask 261120
  %v260 = vsel %vm258, %v255, 0
  %v263 = vsel %vm258, %v239, 0
  %v266 = vsel %vm258, %v240, 0
  %v269 = vsel %vm258, %v241, 0
  %v272 = vsel %vm258, %v242, 0
  %v275 = vsel %vm258, %v243, 0
  %v278 = vsel %vm258, %v244, 0
  %v281 = vsel %vm258, %v245, 0
  %v284 = vsel %vm258, %v246, 0
  %v287 = vsel %vm258, %v247, 0
  %v290 = vsel %vm258, %v248, 0
  %v293 = vsel %vm258, %v249, 0
  %v296 = vsel %vm258, %v250, 0
  %v299 = vsel %vm258, %v251, 0
  %v302 = vsel %vm258, %v252, 0
  %v305 = vsel %vm258, %v253, 0
  %v308 = vsel %vm258, %v254, 0
  %310 = vmatprep.subr.mxu0 0.0
  %311 = vmatpush1.xpose.msra.mxu0 %v263
  %312 = vmatprep.subr.mxu0 0.0
  %313 = vmatpush1.xpose.msra.mxu0 %v266
  %314 = vmatprep.subr.mxu0 0.0
  %315 = vmatpush1.xpose.msra.mxu0 %v269
  %316 = vmatprep.subr.mxu0 0.0
  %317 = vmatpush1.xpose.msra.mxu0 %v272
  %318 = vmatprep.subr.mxu0 0.0
  %319 = vmatpush1.xpose.msra.mxu0 %v275
  %320 = vmatprep.subr.mxu0 0.0
  %321 = vmatpush1.xpose.msra.mxu0 %v278
  %322 = vmatprep.subr.mxu0 0.0
  %323 = vmatpush1.xpose.msra.mxu0 %v281
  %324 = vmatprep.subr.mxu0 0.0
  %325 = vmatpush1.xpose.msra.mxu0 %v284
  %326 = vmatprep.subr.mxu0 0.0
  %327 = vmatpush1.xpose.msra.mxu0 %v287
  %328 = vmatprep.subr.mxu0 0.0
  %329 = vmatpush1.xpose.msra.mxu0 %v290
  %330 = vmatprep.subr.mxu0 0.0
  %331 = vmatpush1.xpose.msra.mxu0 %v293
  %332 = vmatprep.subr.mxu0 0.0
  %333 = vmatpush1.xpose.msra.mxu0 %v296
  %334 = vmatprep.subr.mxu0 0.0
  %335 = vmatpush1.xpose.msra.mxu0 %v299
  %336 = vmatprep.subr.mxu0 0.0
  %337 = vmatpush1.xpose.msra.mxu0 %v302
  %338 = vmatprep.subr.mxu0 0.0
  %339 = vmatpush1.xpose.msra.mxu0 %v305
  %340 = vmatprep.subr.mxu0 0.0
  %341 = vmatpush1.xpose.msra.mxu0 %v308
  %342 = vmatprep.subr.mxu0 0.0
  %343 = vmatpush1.xpose.msra.mxu0 0.0
  %344 = vmatprep.subr.mxu0 0.0
  %345 = vmatpush1.xpose.msra.mxu0 0.0
  %346 = vmatprep.subr.mxu0 0.0
  %347 = vmatpush1.xpose.msra.mxu0 0.0
  %348 = vmatprep.subr.mxu0 0.0
  %349 = vmatpush1.xpose.msra.mxu0 0.0
  %350 = vmatprep.subr.mxu0 0.0
  %351 = vmatpush1.xpose.msra.mxu0 0.0
  %352 = vmatprep.subr.mxu0 0.0
  %353 = vmatpush1.xpose.msra.mxu0 0.0
  %354 = vmatprep.subr.mxu0 0.0
  %355 = vmatpush1.xpose.msra.mxu0 0.0
  %356 = vmatprep.subr.mxu0 0.0
  %357 = vmatpush1.xpose.msra.mxu0 0.0
  %358 = vmatprep.subr.mxu0 0.0
  %359 = vmatpush1.xpose.msra.mxu0 0.0
  %360 = vmatprep.subr.mxu0 0.0
  %361 = vmatpush1.xpose.msra.mxu0 0.0
  %362 = vmatprep.subr.mxu0 0.0
  %363 = vmatpush1.xpose.msra.mxu0 0.0
  %364 = vmatprep.subr.mxu0 0.0
  %365 = vmatpush1.xpose.msra.mxu0 0.0
  %366 = vmatprep.subr.mxu0 0.0
  %367 = vmatpush1.xpose.msra.mxu0 0.0
  %368 = vmatprep.subr.mxu0 0.0
  %369 = vmatpush1.xpose.msra.mxu0 0.0
  %370 = vmatprep.subr.mxu0 0.0
  %371 = vmatpush1.xpose.msra.mxu0 0.0
  %372 = vmatprep.subr.mxu0 0.0
  %373 = vmatpush1.xpose.msra.mxu0 0.0
  %374 = vmatprep.mubr.f32.mxu0 0.0
  %375 = vmatmul.mubr.f32.gmra.mrb[0].mxu0 %v260
  %v376 = vpop.f32.mrb[0].mxu0
  %v377 = vadd.f32 %v257, %v376
  %v378 = vpop.f32.mrb[0].mxu0
  %379 = vdwg.mxu0
  %v380 = vsub.f32 0.0, %v377
  %v381 = vmul.f32 %v380, 1.442695
  %v382 = vpow.pop %v381
  %v383 = vadd.f32 %v382, 1.0
  %v384 = vrcp.pop %v383
  %385 = vst [vmem:[%s5] sm:$0x1] %v384
  // Predicated region
  $region22: #{enhanced_nn_forward.1} parent=0 // pred_check
    _
  $region23: #{enhanced_nn_forward.1} parent=0 // pred_check_branch
    %387 = sbr.rel (0) target = $region25
  $region24: #{enhanced_nn_forward.1} parent=0 // pred_region
    _
  $region25: #{enhanced_nn_forward.1} parent=0 // pred_fallthru
    _
  // Predicated region
  $region26: #{enhanced_nn_forward.1} parent=0 // pred_check
    _
  $region27: #{enhanced_nn_forward.1} parent=0 // pred_check_branch
    %389 = sbr.rel (0) target = $region29
  $region28: #{enhanced_nn_forward.1} parent=0 // pred_region
    _
  $region29: #{enhanced_nn_forward.1} parent=0 // pred_fallthru
    _

</llo_original>
